<compile_context>
chip_gen: v7x
topology: tpu7x:2x2x1
jax: 0.10.0
libtpu: 0.0.40
codegen_flags: <defaults>
</compile_context>

<pallas_src>
import jax
import jax.numpy as jnp
from jax.experimental import pallas as pl
from jax.experimental.pallas import tpu as pltpu


def _locked_dropout_kernel(x_ref, mask_ref, o_ref):
    # x_ref: (tile_T, B*D), mask_ref: (1, B*D) — both already in x.dtype
    # (mask pre-scaled by 1/keep_prob in the wrapper). Pure broadcast multiply.
    o_ref[...] = x_ref[...] * mask_ref[...]


def _sublane_packing(dtype):
    """Rows per packed sublane tile: 8 for f32, 16 for bf16, 32 for int8/fp8."""
    itemsize = jnp.dtype(dtype).itemsize
    return max(8, 32 // max(itemsize, 1))


def _choose_tile_t(T, row_bytes, packing, target_bytes=8 << 20):
    """Pick a T tile: multiple of the sublane packing (or full T), ~8 MiB cap,
    >= 2 grid steps when T allows (megacore), preferring tiles that divide T."""
    if T <= packing:
        return T
    tile = target_bytes // max(row_bytes, 1)
    tile = (tile // packing) * packing
    tile = max(packing, min(tile, T))
    # Ensure at least 2 grid steps so both v7x TensorCores get work.
    if tile >= T and T >= 2 * packing:
        tile = max(packing, (((T + 1) // 2) // packing) * packing)
    # Prefer a tile that divides T (no masked partial store on the last step),
    # but do not shrink below half the roofline-sized tile.
    if tile < T and T % tile != 0:
        lo = max(packing, ((tile // 2) // packing) * packing)
        cand = tile - packing
        while cand >= lo:
            if T % cand == 0:
                tile = cand
                break
            cand -= packing
    return tile


def locked_dropout(x, dropout=0.5, seed=0, *, training=True, tile_t=None):
    """Pallas equivalent of LockedDropout.forward.

    In eval mode or when dropout == 0 this is the identity, exactly like the
    PyTorch module. `seed` selects the Bernoulli mask (callers should vary it
    across dropout sites so masks are not correlated between layers).
    """
    if (not training) or (not dropout):
        return x

    keep_prob = 1.0 - float(dropout)
    T, B, D = x.shape
    BD = B * D

    # Locked mask: one (1, B*D) Bernoulli(keep_prob) draw, shared across T,
    # pre-scaled by 1/keep_prob in f32, then cast once to x.dtype so the
    # kernel multiply stays in the activation dtype.
    key = jax.random.PRNGKey(seed)
    keep = jax.random.bernoulli(key, p=keep_prob, shape=(1, BD))
    mask = (keep.astype(jnp.float32) * jnp.float32(1.0 / keep_prob)).astype(x.dtype)

    # Lane-dense layout: (T, B*D); the last dim is the full array extent so the
    # (8, 128) BlockSpec constraint is always satisfied on the lane axis.
    # (If B*D is not a multiple of 128 the kernel stays legal but stores become
    # masked partial stores — fine for small shapes, document for real models.)
    x2 = x.reshape(T, BD)

    packing = _sublane_packing(x.dtype)
    row_bytes = BD * x.dtype.itemsize
    if tile_t is None:
        tile_t = _choose_tile_t(T, row_bytes, packing)
    else:
        tile_t = max(1, int(tile_t))
        if tile_t < T:
            tile_t = max(packing, (tile_t // packing) * packing)
        tile_t = min(tile_t, T)  # clamp AFTER rounding (T < packing edge case)

    grid = (pl.cdiv(T, tile_t),)

    out2 = pl.pallas_call(
        _locked_dropout_kernel,
        out_shape=jax.ShapeDtypeStruct((T, BD), x.dtype),
        grid=grid,
        in_specs=[
            pl.BlockSpec((tile_t, BD), lambda t: (t, 0)),  # x tile (pipelined)
            pl.BlockSpec((1, BD), lambda t: (0, 0)),       # locked mask (resident)
        ],
        out_specs=pl.BlockSpec((tile_t, BD), lambda t: (t, 0)),
        compiler_params=pltpu.CompilerParams(
            dimension_semantics=("parallel",),
            # 2 x-tiles + 2 out-tiles (double buffered, <=8 MiB each) + mask
            # ~= 32-34 MiB: under this limit and under v7x's 64 MiB physical.
            vmem_limit_bytes=48 << 20,
        ),
    )(x2, mask)

    return out2.reshape(T, B, D)


class RNNModel:
    """JAX mirror of the reference RNNModel (config holder + LockedDropout)."""

    def __init__(self, config):
        self.config = config
        self.dim_embedding = config["dim_embedding"]
        self.dim_elmo_embedding = config.get("dim_elmo_embedding", 0)
        if self.dim_elmo_embedding > 0:
            self.dim_rnn_input = self.dim_elmo_embedding
        else:
            self.dim_rnn_input = self.dim_embedding
        self.dim_hidden = config["dim_hidden"]
        self.vocab_size = config["vocab_size"]
        self.label_vocab_size = config["label_vocab_size"]
        self.n_layers = config["n_layers"]
        self.dropout_embedding = config["dropout_embedding"]
        self.dropout_hidden = config["dropout_hidden"]
        self.dropout_output = config["dropout_output"]
        self.bidirectional = config["bidirectional"]
        self.n_directions = 2 if self.bidirectional else 1
        self.training = True

    def dropout(self, x, dropout=0.5, seed=0):
        return locked_dropout(x, dropout, seed, training=self.training)

    def forward(self, *args, **kwargs):
        # TODO(synk): reference RNNModel.forward raises NotImplementedError;
        # only the LockedDropout sub-module has compute (kernel above).
        raise NotImplementedError()


if __name__ == "__main__":
    config = dict(
        dim_embedding=128,
        dim_elmo_embedding=0,
        dim_hidden=32,
        vocab_size=1000,
        label_vocab_size=10,
        n_layers=1,
        dropout_embedding=0.5,
        dropout_hidden=0.3,
        dropout_output=0.4,
        bidirectional=True,
    )
    model = RNNModel(config)

    # Small deterministic input: (T, B, D) = (32, 4, 128). Auto tiling picks a
    # 2-step grid (tile_t=16); the explicit tile_t=8 run exercises a 4-step grid.
    T, B, D = 32, 4, config["dim_embedding"]
    key = jax.random.PRNGKey(0)
    x = jax.random.normal(key, (T, B, D), dtype=jnp.float32)

    # Eval mode (or dropout == 0) is the identity, like the PyTorch module.
    model.training = False
    y_eval = model.dropout(x, config["dropout_embedding"])
    y_eval = jax.block_until_ready(y_eval)
    assert bool(jnp.all(y_eval == x))

    # Training mode: locked dropout, mask shared across the time axis.
    model.training = True
    y = locked_dropout(x, config["dropout_embedding"], seed=0, training=True, tile_t=8)
    y = jax.block_until_ready(y)

    keep = 1.0 - config["dropout_embedding"]
    ratio = y / x  # x ~ normal, nonzero a.s.
    vals_ok = jnp.all(
        jnp.isclose(ratio, 0.0, atol=1e-5) | jnp.isclose(ratio, 1.0 / keep, atol=1e-4)
    )
    locked_ok = jnp.all(jnp.isclose(ratio, ratio[0:1], atol=1e-4))
    assert bool(vals_ok), "mask values must be 0 or 1/(1-p)"
    assert bool(locked_ok), "mask must be identical across the time axis"

    # Also exercise the default (auto, roofline-sized) tile choice.
    y2 = locked_dropout(x, config["dropout_embedding"], seed=0, training=True)
    y2 = jax.block_until_ready(y2)
    assert bool(jnp.allclose(y, y2)), "tiling must not change the result"

    print("KERNEL_OK")
</pallas_src>

<mosaic_0001>
module attributes {stable_mosaic.version = 11 : i64} {
  func.func @_locked_dropout_kernel(%arg0: i32, %arg1: memref<8x512xf32, #tpu.memory_space<vmem>>, %arg2: memref<1x512xf32, #tpu.memory_space<vmem>>, %arg3: memref<8x512xf32, #tpu.memory_space<vmem>>) attributes {dimension_semantics = [#tpu.dimension_semantics<parallel>], iteration_bounds = array<i64: 4>, scalar_prefetch = 0 : i64, scratch_operands = 0 : i64, tpu.core_type = #tpu.core_type<tc>, window_params = [{transform_indices = @transform_0, window_bounds = array<i64: 8, 512>}, {pipeline_mode = #tpu.pipeline_mode<synchronous>, transform_indices = @transform_1, window_bounds = array<i64: 1, 512>}, {transform_indices = @transform_2, window_bounds = array<i64: 8, 512>}]} {
    %c0 = arith.constant 0 : index
    %c0_0 = arith.constant 0 : index
    %0 = vector.load %arg1[%c0, %c0_0] : memref<8x512xf32, #tpu.memory_space<vmem>>, vector<8x512xf32>
    %c0_1 = arith.constant 0 : index
    %c0_2 = arith.constant 0 : index
    %1 = vector.load %arg2[%c0_1, %c0_2] : memref<1x512xf32, #tpu.memory_space<vmem>>, vector<1x512xf32>
    %2 = vector.broadcast %1 : vector<1x512xf32> to vector<8x512xf32>
    %3 = arith.mulf %0, %2 : vector<8x512xf32>
    %c0_3 = arith.constant 0 : index
    %c0_4 = arith.constant 0 : index
    %4 = vector.load %arg3[%c0_3, %c0_4] : memref<8x512xf32, #tpu.memory_space<vmem>>, vector<8x512xf32>
    tpu.vector_store %arg3[%c0_3, %c0_4], %3 {strides = array<i32>} : memref<8x512xf32, #tpu.memory_space<vmem>>, vector<8x512xf32>,
    return
  }
  func.func @transform_0(%arg0: i32) -> (i32, i32) {
    %c0_i32 = arith.constant 0 : i32
    %c0_i32_0 = arith.constant 0 : i32
    return %arg0, %c0_i32 : i32, i32
  }
  func.func @transform_1(%arg0: i32) -> (i32, i32) {
    %c0_i32 = arith.constant 0 : i32
    %c0_i32_0 = arith.constant 0 : i32
    %c0_i32_1 = arith.constant 0 : i32
    return %c0_i32, %c0_i32_0 : i32, i32
  }
  func.func @transform_2(%arg0: i32) -> (i32, i32) {
    %c0_i32 = arith.constant 0 : i32
    %c0_i32_0 = arith.constant 0 : i32
    return %arg0, %c0_i32 : i32, i32
  }
}

</mosaic_0001>

<llo_original>
// kernel: tpu_custom_call.1
$region0: #{tpu_custom_call.1}
  #allocation0 [shape = 'u32[]', space=smem, size = 0x4, offset = 0x4, fixed_abs, tag = 'smem constant byte address 0x4 - core index']
  #allocation1 [shape = 'u32[144,128]{1,0:T(1,128)}', space=vmem, size = 0x12000, scoped, tag = 'internal scratch']
  %s0 = inlined_call_operand.hbm [shape: f32[32,512], index: 0, kind: input, shape index: {}]
  %s1 = inlined_call_operand.hbm [shape: f32[1,512], index: 1, kind: input, shape index: {}]
  %s2 = inlined_call_operand.hbm [shape: f32[32,512], index: 2, kind: output, shape index: {}]
  %s3 = sld [smem:[#allocation0]]
  $region49: #{tpu_custom_call.1} parent=0
    _
  %s5 = ssub.s32 1, %s3
  %s6 = scalar_select 0, %s5, %s3
  $region1: #{tpu_custom_call.1} parent=0
    #allocation2 [shape = 'u8[32768]{0}', space=vmem, size = 0x8000, scoped, tag = 'input window, operand 0']
    #allocation3 [shape = 's32[2]{0}', space=sflag, size = 0x8, scoped, tag = 'scoped memory for tpu_custom_call.1']
    #allocation4 [shape = 's32[2]{0}', space=sflag, size = 0x8, scoped, tag = 'scoped memory for tpu_custom_call.1']
    #allocation5 [shape = 'u8[2048]{0}', space=vmem, size = 0x800, scoped, tag = 'input window, operand 1, single buffered']
    #allocation6 [shape = 's32[1]{0}', space=sflag, size = 0x4, scoped, tag = 'scoped memory for tpu_custom_call.1']
    #allocation7 [shape = 'u8[32768]{0}', space=vmem, size = 0x8000, scoped, tag = 'output window, operand 0']
    %7 = vsyncpa [#allocation3], 0
    %s8 = scalar_lea.sflag [#allocation3], 1
    %9 = vsyncpa %s8, 0
    %10 = vsyncpa [#allocation6], 0
    %11 = vsyncpa [#allocation4], 0
    %s12 = scalar_lea.sflag [#allocation4], 1
    %13 = vsyncpa %s12, 0
    loop: start=0, step=1, limit=6
    $region2: #{tpu_custom_call.1} parent=1 // loop_pre_header
      _
    $region3: #{tpu_custom_call.1} parent=1 // loop_header
      %s15 = sphi 0, %s19
      %p16 = scmp.ge.s32.totalorder %s15, 6
      %s25 = sphi 0, %s27
      %s28 = sphi 0, %s25
      %s29 = sphi 0, %s28
      %s45 = sphi 0, %s29
      %s49 = sphi 0, %s49
      %s51 = sphi 0, %s49
      %s52 = sphi 0, %s51
      %s66 = sphi 0, %s52
      %s72 = sphi 0, %s74
      %s75 = sphi 0, %s72
      %s76 = sphi 0, %s75
      %s92 = sphi 0, %s76
    $region4: #{tpu_custom_call.1} parent=1 // loop_header_branch
      %18 = sbr.rel (%p16) target = $region8
    $region5: #{tpu_custom_call.1} parent=1 // loop_body
      %s20 = ssub.s32 %s15, 1
      %s21 = ssub.s32 %s15, 2
      %s22 = sadd.s32 %s15, 1
      %s23 = ssub.s32 %s15, %s22
      %p24 = scmp.eq.s32.totalorder %s23, 0
      %s26 = sadd.s32 %s25, 1
      %s27 = scalar_select %p24, %s25, %s26
      %p30 = pneg %p24
      %p31 = scmp.eq.s32.totalorder %s15, 3
      %p32 = por %p30, %p31
      %p33 = scmp.ne.s32.totalorder %s25, %s28
      %p34 = scmp.eq.s32.totalorder %s15, 0
      %p35 = por %p33, %p34
      %p36 = scmp.ne.s32.totalorder %s25, %s28
      %p37 = scmp.eq.s32.totalorder %s20, 3
      %p38 = por %p36, %p37
      %p39 = scmp.ne.s32.totalorder %s28, %s29
      %p40 = scmp.eq.s32.totalorder %s20, 0
      %p41 = por %p39, %p40
      %p42 = scmp.ne.s32.totalorder %s28, %s29
      %p43 = scmp.eq.s32.totalorder %s21, 3
      %p44 = por %p42, %p43
      %p46 = scmp.ne.s32.totalorder %s29, %s45
      %p47 = scmp.eq.s32.totalorder %s21, 0
      %p48 = por %p46, %p47
      %s50 = sadd.s32 %s49, 1
      %p53 = scmp.eq.s32.totalorder %s15, 3
      %p54 = scmp.ne.s32.totalorder %s49, %s51
      %p55 = scmp.eq.s32.totalorder %s15, 0
      %p56 = por %p54, %p55
      %p57 = scmp.ne.s32.totalorder %s49, %s51
      %p58 = scmp.eq.s32.totalorder %s20, 3
      %p59 = por %p57, %p58
      %p60 = scmp.ne.s32.totalorder %s51, %s52
      %p61 = scmp.eq.s32.totalorder %s20, 0
      %p62 = por %p60, %p61
      %p63 = scmp.ne.s32.totalorder %s51, %s52
      %p64 = scmp.eq.s32.totalorder %s21, 3
      %p65 = por %p63, %p64
      %p67 = scmp.ne.s32.totalorder %s52, %s66
      %p68 = scmp.eq.s32.totalorder %s21, 0
      %p69 = por %p67, %p68
      %s70 = ssub.s32 %s15, %s22
      %p71 = scmp.eq.s32.totalorder %s70, 0
      %s73 = sadd.s32 %s72, 1
      %s74 = scalar_select %p71, %s72, %s73
      %p77 = pneg %p71
      %p78 = scmp.eq.s32.totalorder %s15, 3
      %p79 = por %p77, %p78
      %p80 = scmp.ne.s32.totalorder %s72, %s75
      %p81 = scmp.eq.s32.totalorder %s15, 0
      %p82 = por %p80, %p81
      %p83 = scmp.ne.s32.totalorder %s72, %s75
      %p84 = scmp.eq.s32.totalorder %s20, 3
      %p85 = por %p83, %p84
      %p86 = scmp.ne.s32.totalorder %s75, %s76
      %p87 = scmp.eq.s32.totalorder %s20, 0
      %p88 = por %p86, %p87
      %p89 = scmp.ne.s32.totalorder %s75, %s76
      %p90 = scmp.eq.s32.totalorder %s21, 3
      %p91 = por %p89, %p90
      %p93 = scmp.ne.s32.totalorder %s76, %s92
      %p94 = scmp.eq.s32.totalorder %s21, 0
      %p95 = por %p93, %p94
      %p96 = scmp.le.s32.totalorder 1, %s15
      %p97 = scmp.lt.s32.totalorder %s15, 5
      %p98 = pnand %p96, %p97
      %p99 = pneg %p98
      // Predicated region
      $region9: #{tpu_custom_call.1} parent=5 // pred_check
        _
      $region10: #{tpu_custom_call.1} parent=5 // pred_check_branch
        %101 = sbr.rel (%p98) target = $region12
      $region11: #{tpu_custom_call.1} parent=5 // pred_region
        %s102 = ssub.s32 %s15, 1
        // Predicated region
        $region13: #{tpu_custom_call.1} parent=11 // pred_check
          %p103 = pneg %p62
        $region14: #{tpu_custom_call.1} parent=11 // pred_check_branch
          %105 = sbr.rel (%p103) target = $region16
        $region15: #{tpu_custom_call.1} parent=11 // pred_region
          %s107 = ssub.s32 64, 64
          %108 = vsyncadd [#allocation6], %s107
          %s110 = sshll.u32 [#allocation5], 4
          %s111 = int_to_ptr.vmem [resolvable:$true] %s110
          %113 = dma.hbm_to_vmem [thread:$0]  %s1, 64, %s111, [#allocation6]
        $region16: #{tpu_custom_call.1} parent=11 // pred_fallthru
          _
      $region12: #{tpu_custom_call.1} parent=5 // pred_fallthru
        _
      %p114 = scmp.lt.s32.totalorder %s15, 4
      // Predicated region
      $region17: #{tpu_custom_call.1} parent=5 // pred_check
        %p115 = pneg %p114
      $region18: #{tpu_custom_call.1} parent=5 // pred_check_branch
        %117 = sbr.rel (%p115) target = $region20
      $region19: #{tpu_custom_call.1} parent=5 // pred_region
        // Predicated region
        $region21: #{tpu_custom_call.1} parent=19 // pred_check
          %p118 = pneg %p35
        $region22: #{tpu_custom_call.1} parent=19 // pred_check_branch
          %120 = sbr.rel (%p118) target = $region24
        $region23: #{tpu_custom_call.1} parent=19 // pred_region
          %s121 = sand.u32 %s25, 1
          %s122 = scalar_lea.sflag [#allocation3], %s121
          %s123 = sand.u32 %s25, 1
          %s124 = smul.addr %s123, 32
          %s125 = scalar_lea.vmem [#allocation2], %s124
          %s127 = ssub.s32 512, 512
          %128 = vsyncadd %s122, %s127
          %s129 = smul.addr %s15, 4
          %s130 = smul.addr %s129, 128
          %s131 = scalar_lea.hbm %s0, %s130
          %s133 = sshll.u32 %s125, 4
          %s134 = int_to_ptr.vmem [resolvable:$true] %s133
          %136 = dma.hbm_to_vmem [thread:$0]  %s131, 512, %s134, %s122
        $region24: #{tpu_custom_call.1} parent=19 // pred_fallthru
          _
      $region20: #{tpu_custom_call.1} parent=5 // pred_fallthru
        _
      %p137 = scmp.le.s32.totalorder 1, %s15
      %p138 = scmp.lt.s32.totalorder %s15, 5
      %p139 = pnand %p137, %p138
      %p140 = pneg %p139
      // Predicated region
      $region25: #{tpu_custom_call.1} parent=5 // pred_check
        _
      $region26: #{tpu_custom_call.1} parent=5 // pred_check_branch
        %142 = sbr.rel (%p139) target = $region28
      $region27: #{tpu_custom_call.1} parent=5 // pred_region
        %s143 = ssub.s32 %s15, 1
        %s144 = sand.u32 %s28, 1
        %s145 = scalar_lea.sflag [#allocation3], %s144
        %s146 = sand.u32 %s28, 1
        %s147 = smul.addr %s146, 32
        %s148 = scalar_lea.vmem [#allocation2], %s147
        // Predicated region
        $region29: #{tpu_custom_call.1} parent=27 // pred_check
          %p149 = pneg %p41
        $region30: #{tpu_custom_call.1} parent=27 // pred_check_branch
          %151 = sbr.rel (%p149) target = $region32
        $region31: #{tpu_custom_call.1} parent=27 // pred_region
          %152 = dma.done %s145, 512
        $region32: #{tpu_custom_call.1} parent=27 // pred_fallthru
          _
        // Predicated region
        $region33: #{tpu_custom_call.1} parent=27 // pred_check
          %p153 = pneg %p62
        $region34: #{tpu_custom_call.1} parent=27 // pred_check_branch
          %155 = sbr.rel (%p153) target = $region36
        $region35: #{tpu_custom_call.1} parent=27 // pred_region
          %156 = dma.done [#allocation6], 64
        $region36: #{tpu_custom_call.1} parent=27 // pred_fallthru
          _
        %s157 = sand.u32 %s28, 1
        %s158 = scalar_lea.sflag [#allocation3], %s157
        %s159 = sand.u32 %s28, 1
        %s160 = smul.addr %s159, 32
        %s161 = scalar_lea.vmem [#allocation2], %s160
        %p162 = pneg %p41
        %p163 = pneg %p38
        %p164 = pneg %p62
        %p165 = pneg %p59
        %p166 = pneg %p88
        %p167 = pneg %p85
        %s168 = sand.u32 %s75, 1
        %s169 = scalar_lea.sflag [#allocation4], %s168
        %s170 = sand.u32 %s75, 1
        %s171 = smul.addr %s170, 32
        %s172 = scalar_lea.vmem [#allocation7], %s171
        %v173 = vld [vmem:[%s148] sm:$0xff]
        %v174 = vld [vmem:[%s148 + $0x8] sm:$0xff]
        %v175 = vld [vmem:[%s148 + $0x10] sm:$0xff]
        %v176 = vld [vmem:[%s148 + $0x18] sm:$0xff]
        %v177 = vld [vmem:[#allocation5] sm:$0xf]
        %v179 = vlaneseq
        %v180 = vshrl.u32 %v179, 7
        %v181 = vsub.s32 0, %v180
        %v182 = vrot.slane %v177, %v181
        %v183 = vlaneseq
        %v184 = vshrl.u32 %v183, 7
        %v185 = vsub.s32 1, %v184
        %v186 = vrot.slane %v177, %v185
        %v187 = vlaneseq
        %v188 = vshrl.u32 %v187, 7
        %v189 = vsub.s32 2, %v188
        %v190 = vrot.slane %v177, %v189
        %v191 = vlaneseq
        %v192 = vshrl.u32 %v191, 7
        %v193 = vsub.s32 3, %v192
        %v194 = vrot.slane %v177, %v193
        %v199 = vmul.f32 %v173, %v182
        %v200 = vmul.f32 %v174, %v186
        %v201 = vmul.f32 %v175, %v190
        %v202 = vmul.f32 %v176, %v194
        %203 = vst [vmem:[%s172] sm:$0xff] %v199
        %204 = vst [vmem:[%s172 + $0x8] sm:$0xff] %v200
        %205 = vst [vmem:[%s172 + $0x10] sm:$0xff] %v201
        %206 = vst [vmem:[%s172 + $0x18] sm:$0xff] %v202
        %s207 = sand.u32 %s75, 1
        %s208 = scalar_lea.sflag [#allocation4], %s207
        %s209 = sand.u32 %s75, 1
        %s210 = smul.addr %s209, 32
        %s211 = scalar_lea.vmem [#allocation7], %s210
        // Predicated region
        $region37: #{tpu_custom_call.1} parent=27 // pred_check
          %p212 = pneg %p85
        $region38: #{tpu_custom_call.1} parent=27 // pred_check_branch
          %214 = sbr.rel (%p212) target = $region40
        $region39: #{tpu_custom_call.1} parent=27 // pred_region
          %s216 = ssub.s32 512, 512
          %217 = vsyncadd %s208, %s216
          %s218 = smul.addr %s20, 4
          %s219 = smul.addr %s218, 128
          %s220 = scalar_lea.hbm %s2, %s219
          %s222 = sshll.u32 %s211, 4
          %s223 = int_to_ptr.vmem [resolvable:$true] %s222
          %225 = dma.vmem_to_hbm [thread:$0]  %s223, 512, %s220, %s208
        $region40: #{tpu_custom_call.1} parent=27 // pred_fallthru
          _
      $region28: #{tpu_custom_call.1} parent=5 // pred_fallthru
        _
      %p226 = scmp.le.s32.totalorder 2, %s15
      // Predicated region
      $region41: #{tpu_custom_call.1} parent=5 // pred_check
        %p227 = pneg %p226
      $region42: #{tpu_custom_call.1} parent=5 // pred_check_branch
        %229 = sbr.rel (%p227) target = $region44
      $region43: #{tpu_custom_call.1} parent=5 // pred_region
        %s230 = ssub.s32 %s15, 2
        // Predicated region
        $region45: #{tpu_custom_call.1} parent=43 // pred_check
          %p231 = pneg %p91
        $region46: #{tpu_custom_call.1} parent=43 // pred_check_branch
          %233 = sbr.rel (%p231) target = $region48
        $region47: #{tpu_custom_call.1} parent=43 // pred_region
          %s234 = sand.u32 %s76, 1
          %s235 = scalar_lea.sflag [#allocation4], %s234
          %s236 = sand.u32 %s76, 1
          %s237 = smul.addr %s236, 32
          %s238 = scalar_lea.vmem [#allocation7], %s237
          %239 = dma.done %s235, 512
        $region48: #{tpu_custom_call.1} parent=43 // pred_fallthru
          _
      $region44: #{tpu_custom_call.1} parent=5 // pred_fallthru
        _
    $region6: #{tpu_custom_call.1} parent=1 // loop_footer
      %s19 = sadd.s32 1, %s15
    $region7: #{tpu_custom_call.1} parent=1 // loop_footer_branch
      %14 = sbr.rel target = $region3
    $region8: #{tpu_custom_call.1} parent=1 // loop_exit
      _
    %240 = vsyncpa [#allocation3], 1
    %s241 = scalar_lea.sflag [#allocation3], 1
    %242 = vsyncpa %s241, 1
    %243 = vsyncpa [#allocation6], 1
    %244 = vsyncpa [#allocation4], 1
    %s245 = scalar_lea.sflag [#allocation4], 1
    %246 = vsyncpa %s245, 1

</llo_original>
